<compile_context>
chip_gen: v6e
topology: v6e:2x2x1
jax: 0.10.0
libtpu: 0.0.40
codegen_flags: <defaults>
</compile_context>

<pallas_src>
import jax
import jax.numpy as jnp
from jax.experimental import pallas as pl
from jax.experimental.pallas import tpu as pltpu

MODEL_DIM = 512
HIDDEN = 128
LABELS = 10        # args.data_name == 'cifar10'
OUT_PAD = 128      # lane-dense padded output width
MAX_TILE_N = 2048  # ~8 MiB total working set double-buffered; safe on v5e/v6e/v7x


def _round_up(x, m):
    return ((x + m - 1) // m) * m


def _probe_kernel(x_ref, w1_ref, b1_ref, w2_ref, b2_ref, o_ref):
    # fc1: (TILE_N, 512)bf16 @ (512, 128)bf16 -> f32 acc, + bias, relu
    h = jnp.dot(x_ref[...], w1_ref[...], preferred_element_type=jnp.float32)
    h = jnp.maximum(h + b1_ref[...], 0.0)
    # fc2: (TILE_N, 128)bf16 @ (128, 128)bf16 (zero-padded cols) -> f32 acc, + bias
    out = jnp.dot(h.astype(w2_ref.dtype), w2_ref[...],
                  preferred_element_type=jnp.float32) + b2_ref[...]
    o_ref[...] = out.astype(o_ref.dtype)


def bayes_probe_forward(x, w1, b1, w2, b2):
    """x: any shape whose total size is divisible by 512 (flattened to (-1, 512)).

    w1: (512, 128) effective fc1 weight (already W_mu * z_mu, transposed)
    b1: (1, 128)   fc1 bias
    w2: (128, LABELS) effective fc2 weight (transposed)
    b2: (1, LABELS)   fc2 bias
    Returns f32 logits of shape (N, LABELS).
    """
    x2d = x.reshape(-1, MODEL_DIM)
    n = x2d.shape[0]

    # Tile the batch axis; keep tiles multiples of 16 (bf16 sublane packing).
    tile_n = min(MAX_TILE_N, _round_up(n, 16))
    n_pad = _round_up(n, tile_n)
    if n_pad != n:
        x2d = jnp.pad(x2d, ((0, n_pad - n), (0, 0)))

    # bf16 inputs to the MXU, f32 biases added after f32 accumulation.
    x2d = x2d.astype(jnp.bfloat16)
    w1b = w1.astype(jnp.bfloat16)
    w2p = jnp.zeros((HIDDEN, OUT_PAD), jnp.bfloat16).at[:, :LABELS].set(
        w2.astype(jnp.bfloat16))
    b1f = b1.astype(jnp.float32)
    b2p = jnp.zeros((1, OUT_PAD), jnp.float32).at[:, :LABELS].set(
        b2.astype(jnp.float32))

    grid = (n_pad // tile_n,)
    weight_bytes = MODEL_DIM * HIDDEN * 2 + HIDDEN * OUT_PAD * 2 + (HIDDEN + OUT_PAD) * 4

    out = pl.pallas_call(
        _probe_kernel,
        out_shape=jax.ShapeDtypeStruct((n_pad, OUT_PAD), jnp.float32),
        grid=grid,
        in_specs=[
            pl.BlockSpec((tile_n, MODEL_DIM), lambda i: (i, 0)),   # x tile (pipelined)
            pl.BlockSpec((MODEL_DIM, HIDDEN), lambda i: (0, 0)),   # w1 (resident)
            pl.BlockSpec((1, HIDDEN), lambda i: (0, 0)),           # b1 (resident)
            pl.BlockSpec((HIDDEN, OUT_PAD), lambda i: (0, 0)),     # w2 padded (resident)
            pl.BlockSpec((1, OUT_PAD), lambda i: (0, 0)),          # b2 padded (resident)
        ],
        out_specs=pl.BlockSpec((tile_n, OUT_PAD), lambda i: (i, 0)),
        compiler_params=pltpu.CompilerParams(
            dimension_semantics=("parallel",)),
        cost_estimate=pl.CostEstimate(
            flops=2 * n_pad * (MODEL_DIM * HIDDEN + HIDDEN * OUT_PAD),
            bytes_accessed=n_pad * MODEL_DIM * 2 + n_pad * OUT_PAD * 4 + weight_bytes,
            transcendentals=0),
    )(x2d, w1b, b1f, w2p, b2p)

    return out[:n, :LABELS]


def init_params(key):
    """Deterministic synthetic init mirroring the LinearGroupNJ parameter shapes."""
    k1, k2, k3, k4, kz1, kz2 = jax.random.split(key, 6)
    # weight_mu: (out, in) in PyTorch; store transposed (in, out) for the kernel.
    w1_mu = jax.random.normal(k1, (HIDDEN, MODEL_DIM), jnp.float32) * (1.0 / jnp.sqrt(MODEL_DIM))
    b1_mu = jax.random.normal(k2, (1, HIDDEN), jnp.float32) * 0.01
    w2_mu = jax.random.normal(k3, (LABELS, HIDDEN), jnp.float32) * (1.0 / jnp.sqrt(HIDDEN))
    b2_mu = jax.random.normal(k4, (1, LABELS), jnp.float32) * 0.01
    # z_mu (per-input-feature multiplicative gate), init ~ N(1, 1e-2) as in GroupNJ.
    z1_mu = 1.0 + 0.1 * jax.random.normal(kz1, (MODEL_DIM,), jnp.float32)
    z2_mu = 1.0 + 0.1 * jax.random.normal(kz2, (HIDDEN,), jnp.float32)
    # Deterministic effective weights: W_eff = weight_mu * z_mu (broadcast over input dim),
    # then transpose to (in, out) for x @ W layout.
    w1 = (w1_mu * z1_mu[None, :]).T  # (512, 128)
    w2 = (w2_mu * z2_mu[None, :]).T  # (128, LABELS)
    return w1, b1_mu, w2, b2_mu


def reference_forward(x, w1, b1, w2, b2):
    """JAX reference using the same bf16-input / f32-accumulate numerics."""
    x2d = x.reshape(-1, MODEL_DIM).astype(jnp.bfloat16)
    h = jnp.dot(x2d, w1.astype(jnp.bfloat16),
                preferred_element_type=jnp.float32) + b1.astype(jnp.float32)
    h = jnp.maximum(h, 0.0)
    out = jnp.dot(h.astype(jnp.bfloat16), w2.astype(jnp.bfloat16),
                  preferred_element_type=jnp.float32) + b2.astype(jnp.float32)
    return out


if __name__ == "__main__":
    key = jax.random.PRNGKey(0)
    kx, kp = jax.random.split(key)

    # Small batch: (2, 4, 512) -> view(-1, 512) -> (8, 512)
    x = jax.random.normal(kx, (2, 4, MODEL_DIM), jnp.float32)
    w1, b1, w2, b2 = init_params(kp)

    out = bayes_probe_forward(x, w1, b1, w2, b2)
    out = jax.block_until_ready(out)

    ref = reference_forward(x, w1, b1, w2, b2)
    assert out.shape == (8, LABELS), out.shape
    assert jnp.allclose(out, ref, atol=1e-2, rtol=1e-2), "mismatch vs JAX reference"

    print("KERNEL_OK")
</pallas_src>

<mosaic_0001>
module attributes {stable_mosaic.version = 11 : i64} {
  func.func @_probe_kernel(%arg0: i32, %arg1: memref<16x512xbf16, #tpu.memory_space<vmem>>, %arg2: memref<512x128xbf16, #tpu.memory_space<vmem>>, %arg3: memref<1x128xf32, #tpu.memory_space<vmem>>, %arg4: memref<128x128xbf16, #tpu.memory_space<vmem>>, %arg5: memref<1x128xf32, #tpu.memory_space<vmem>>, %arg6: memref<16x128xf32, #tpu.memory_space<vmem>>) attributes {dimension_semantics = [#tpu.dimension_semantics<parallel>], iteration_bounds = array<i64: 1>, scalar_prefetch = 0 : i64, scratch_operands = 0 : i64, tpu.core_type = #tpu.core_type<tc>, window_params = [{transform_indices = @transform_0, window_bounds = array<i64: 16, 512>}, {pipeline_mode = #tpu.pipeline_mode<synchronous>, transform_indices = @transform_1, window_bounds = array<i64: 512, 128>}, {pipeline_mode = #tpu.pipeline_mode<synchronous>, transform_indices = @transform_2, window_bounds = array<i64: 1, 128>}, {pipeline_mode = #tpu.pipeline_mode<synchronous>, transform_indices = @transform_3, window_bounds = array<i64: 128, 128>}, {pipeline_mode = #tpu.pipeline_mode<synchronous>, transform_indices = @transform_4, window_bounds = array<i64: 1, 128>}, {transform_indices = @transform_5, window_bounds = array<i64: 16, 128>}]} {
    %c0 = arith.constant 0 : index
    %c0_0 = arith.constant 0 : index
    %0 = vector.load %arg1[%c0, %c0_0] : memref<16x512xbf16, #tpu.memory_space<vmem>>, vector<16x512xbf16>
    %c0_1 = arith.constant 0 : index
    %c0_2 = arith.constant 0 : index
    %1 = vector.load %arg2[%c0_1, %c0_2] : memref<512x128xbf16, #tpu.memory_space<vmem>>, vector<512x128xbf16>
    %cst = arith.constant dense<0.000000e+00> : vector<16x128xf32>
    %2 = tpu.matmul %0, %1, %cst {dimension_numbers = #tpu.dot_dimension_numbers<[1], [0], [0], [1], [0, 0, 1, 1], [], []>} : vector<16x512xbf16>, vector<512x128xbf16>, vector<16x128xf32> -> vector<16x128xf32>
    %c0_3 = arith.constant 0 : index
    %c0_4 = arith.constant 0 : index
    %3 = vector.load %arg3[%c0_3, %c0_4] : memref<1x128xf32, #tpu.memory_space<vmem>>, vector<1x128xf32>
    %4 = vector.broadcast %3 : vector<1x128xf32> to vector<16x128xf32>
    %5 = arith.addf %2, %4 : vector<16x128xf32>
    %cst_5 = arith.constant 0.000000e+00 : f32
    %6 = vector.broadcast %cst_5 : f32 to vector<16x128xf32>
    %7 = arith.maximumf %5, %6 : vector<16x128xf32>
    %8 = arith.truncf %7 : vector<16x128xf32> to vector<16x128xbf16>
    %c0_6 = arith.constant 0 : index
    %c0_7 = arith.constant 0 : index
    %9 = vector.load %arg4[%c0_6, %c0_7] : memref<128x128xbf16, #tpu.memory_space<vmem>>, vector<128x128xbf16>
    %cst_8 = arith.constant dense<0.000000e+00> : vector<16x128xf32>
    %10 = tpu.matmul %8, %9, %cst_8 {dimension_numbers = #tpu.dot_dimension_numbers<[1], [0], [0], [1], [0, 0, 1, 1], [], []>} : vector<16x128xbf16>, vector<128x128xbf16>, vector<16x128xf32> -> vector<16x128xf32>
    %c0_9 = arith.constant 0 : index
    %c0_10 = arith.constant 0 : index
    %11 = vector.load %arg5[%c0_9, %c0_10] : memref<1x128xf32, #tpu.memory_space<vmem>>, vector<1x128xf32>
    %12 = vector.broadcast %11 : vector<1x128xf32> to vector<16x128xf32>
    %13 = arith.addf %10, %12 : vector<16x128xf32>
    %c0_11 = arith.constant 0 : index
    %c0_12 = arith.constant 0 : index
    %14 = vector.load %arg6[%c0_11, %c0_12] : memref<16x128xf32, #tpu.memory_space<vmem>>, vector<16x128xf32>
    tpu.vector_store %arg6[%c0_11, %c0_12], %13 {strides = array<i32>} : memref<16x128xf32, #tpu.memory_space<vmem>>, vector<16x128xf32>,
    return
  }
  func.func @transform_0(%arg0: i32) -> (i32, i32) {
    %c0_i32 = arith.constant 0 : i32
    %c0_i32_0 = arith.constant 0 : i32
    return %arg0, %c0_i32 : i32, i32
  }
  func.func @transform_1(%arg0: i32) -> (i32, i32) {
    %c0_i32 = arith.constant 0 : i32
    %c0_i32_0 = arith.constant 0 : i32
    %c0_i32_1 = arith.constant 0 : i32
    return %c0_i32, %c0_i32_0 : i32, i32
  }
  func.func @transform_2(%arg0: i32) -> (i32, i32) {
    %c0_i32 = arith.constant 0 : i32
    %c0_i32_0 = arith.constant 0 : i32
    %c0_i32_1 = arith.constant 0 : i32
    return %c0_i32, %c0_i32_0 : i32, i32
  }
  func.func @transform_3(%arg0: i32) -> (i32, i32) {
    %c0_i32 = arith.constant 0 : i32
    %c0_i32_0 = arith.constant 0 : i32
    %c0_i32_1 = arith.constant 0 : i32
    return %c0_i32, %c0_i32_0 : i32, i32
  }
  func.func @transform_4(%arg0: i32) -> (i32, i32) {
    %c0_i32 = arith.constant 0 : i32
    %c0_i32_0 = arith.constant 0 : i32
    %c0_i32_1 = arith.constant 0 : i32
    return %c0_i32, %c0_i32_0 : i32, i32
  }
  func.func @transform_5(%arg0: i32) -> (i32, i32) {
    %c0_i32 = arith.constant 0 : i32
    %c0_i32_0 = arith.constant 0 : i32
    return %arg0, %c0_i32 : i32, i32
  }
}

</mosaic_0001>

<llo_original>
// kernel: tpu_custom_call.1
$region0: #{tpu_custom_call.1}
  #allocation0 [shape = 'u32[]', space=smem, size = 0x4, offset = 0x4, fixed_abs, tag = 'smem constant byte address 0x4 - core index']
  #allocation1 [shape = 'u32[144,128]{1,0:T(1,128)}', space=vmem, size = 0x12000, scoped, tag = 'internal scratch']
  %s0 = inlined_call_operand.hbm [shape: bf16[16,512], index: 0, kind: input, shape index: {}]
  %s1 = inlined_call_operand.hbm [shape: bf16[512,128], index: 1, kind: input, shape index: {}]
  %s2 = inlined_call_operand.vmem [shape: f32[1,128], index: 2, kind: input, shape index: {}]
  %s3 = inlined_call_operand.hbm [shape: bf16[128,128], index: 3, kind: input, shape index: {}]
  %s4 = inlined_call_operand.vmem [shape: f32[1,128], index: 4, kind: input, shape index: {}]
  %s5 = inlined_call_operand.hbm [shape: f32[16,128], index: 5, kind: output, shape index: {}]
  %s6 = sld [smem:[#allocation0]]
  $region42: #{tpu_custom_call.1} parent=0
    _
  %s8 = ssub.s32 1, %s6
  %s9 = scalar_select 0, %s8, %s6
  $region1: #{tpu_custom_call.1} parent=0
    #allocation2 [shape = 'u8[16384]{0}', space=vmem, size = 0x4000, scoped, tag = 'input window, operand 0, single buffered']
    #allocation3 [shape = 's32[1]{0}', space=sflag, size = 0x4, scoped, tag = 'scoped memory for tpu_custom_call.1']
    #allocation4 [shape = 's32[1]{0}', space=sflag, size = 0x4, scoped, tag = 'scoped memory for tpu_custom_call.1']
    #allocation5 [shape = 'u8[131072]{0}', space=vmem, size = 0x20000, scoped, tag = 'input window, operand 1, single buffered']
    #allocation6 [shape = 's32[1]{0}', space=sflag, size = 0x4, scoped, tag = 'scoped memory for tpu_custom_call.1']
    #allocation7 [shape = 'u8[32768]{0}', space=vmem, size = 0x8000, scoped, tag = 'input window, operand 3, single buffered']
    #allocation8 [shape = 'u8[8192]{0}', space=vmem, size = 0x2000, scoped, tag = 'output window, operand 0, single buffered']
    %10 = vsyncpa [#allocation3], 0
    %11 = vsyncpa [#allocation6], 0
    %12 = vsyncpa [#allocation4], 0
    // Predicated region
    $region2: #{tpu_custom_call.1} parent=1 // pred_check
      _
    $region3: #{tpu_custom_call.1} parent=1 // pred_check_branch
      %14 = sbr.rel (0) target = $region5
    $region4: #{tpu_custom_call.1} parent=1 // pred_region
      %s16 = ssub.s32 512, 512
      %17 = vsyncadd [#allocation3], %s16
      %s18 = sshll.u32 [#allocation2], 4
      %s19 = int_to_ptr.vmem [resolvable:$true] %s18
      %24 = dma.hbm_to_vmem [thread:$0]  %s0, 512, %s19, [#allocation3], 256, 256, 16
    $region5: #{tpu_custom_call.1} parent=1 // pred_fallthru
      _
    // Predicated region
    $region6: #{tpu_custom_call.1} parent=1 // pred_check
      _
    $region7: #{tpu_custom_call.1} parent=1 // pred_check_branch
      %26 = sbr.rel (0) target = $region9
    $region8: #{tpu_custom_call.1} parent=1 // pred_region
      %s28 = ssub.s32 4096, 4096
      %29 = vsyncadd [#allocation6], %s28
      %s30 = sshll.u32 [#allocation5], 4
      %s31 = int_to_ptr.vmem [resolvable:$true] %s30
      %36 = dma.hbm_to_vmem [thread:$0]  %s1, 4096, %s31, [#allocation6], 64, 64, 4
    $region9: #{tpu_custom_call.1} parent=1 // pred_fallthru
      _
    // Predicated region
    $region10: #{tpu_custom_call.1} parent=1 // pred_check
      _
    $region11: #{tpu_custom_call.1} parent=1 // pred_check_branch
      %38 = sbr.rel (0) target = $region13
    $region12: #{tpu_custom_call.1} parent=1 // pred_region
      _
    $region13: #{tpu_custom_call.1} parent=1 // pred_fallthru
      _
    // Predicated region
    $region14: #{tpu_custom_call.1} parent=1 // pred_check
      _
    $region15: #{tpu_custom_call.1} parent=1 // pred_check_branch
      %40 = sbr.rel (0) target = $region17
    $region16: #{tpu_custom_call.1} parent=1 // pred_region
      %s42 = ssub.s32 1024, 1024
      %43 = vsyncadd [#allocation6], %s42
      %s44 = sshll.u32 [#allocation7], 4
      %s45 = int_to_ptr.vmem [resolvable:$true] %s44
      %50 = dma.hbm_to_vmem [thread:$0]  %s3, 1024, %s45, [#allocation6], 64, 64, 4
    $region17: #{tpu_custom_call.1} parent=1 // pred_fallthru
      _
    // Predicated region
    $region18: #{tpu_custom_call.1} parent=1 // pred_check
      _
    $region19: #{tpu_custom_call.1} parent=1 // pred_check_branch
      %52 = sbr.rel (0) target = $region21
    $region20: #{tpu_custom_call.1} parent=1 // pred_region
      _
    $region21: #{tpu_custom_call.1} parent=1 // pred_fallthru
      _
    // Predicated region
    $region22: #{tpu_custom_call.1} parent=1 // pred_check
      _
    $region23: #{tpu_custom_call.1} parent=1 // pred_check_branch
      %54 = sbr.rel (0) target = $region25
    $region24: #{tpu_custom_call.1} parent=1 // pred_region
      %55 = dma.done [#allocation3], 512
    $region25: #{tpu_custom_call.1} parent=1 // pred_fallthru
      _
    // Predicated region
    $region26: #{tpu_custom_call.1} parent=1 // pred_check
      _
    $region27: #{tpu_custom_call.1} parent=1 // pred_check_branch
      %57 = sbr.rel (0) target = $region29
    $region28: #{tpu_custom_call.1} parent=1 // pred_region
      %58 = dma.done [#allocation6], 4096
    $region29: #{tpu_custom_call.1} parent=1 // pred_fallthru
      _
    // Predicated region
    $region30: #{tpu_custom_call.1} parent=1 // pred_check
      _
    $region31: #{tpu_custom_call.1} parent=1 // pred_check_branch
      %60 = sbr.rel (0) target = $region33
    $region32: #{tpu_custom_call.1} parent=1 // pred_region
      %61 = dma.done [#allocation6], 1024
    $region33: #{tpu_custom_call.1} parent=1 // pred_fallthru
      _
    %v63 = vld [vmem:[#allocation2] sm:$0xff]
    %v64 = vld [vmem:[#allocation2 + $0x8] sm:$0xff]
    %v65 = vld [vmem:[#allocation2 + $0x10] sm:$0xff]
    %v66 = vld [vmem:[#allocation2 + $0x18] sm:$0xff]
    %v67 = vld [vmem:[#allocation5] sm:$0xf]
    %v68 = vld [vmem:[#allocation5 + $0x4] sm:$0xf]
    %v69 = vld [vmem:[#allocation5 + $0x8] sm:$0xf]
    %v70 = vld [vmem:[#allocation5 + $0xc] sm:$0xf]
    %v71 = vld [vmem:[#allocation5 + $0x10] sm:$0xf]
    %v72 = vld [vmem:[#allocation5 + $0x14] sm:$0xf]
    %v73 = vld [vmem:[#allocation5 + $0x18] sm:$0xf]
    %v74 = vld [vmem:[#allocation5 + $0x1c] sm:$0xf]
    %v75 = vld [vmem:[#allocation5 + $0x20] sm:$0xf]
    %v76 = vld [vmem:[#allocation5 + $0x24] sm:$0xf]
    %v77 = vld [vmem:[#allocation5 + $0x28] sm:$0xf]
    %v78 = vld [vmem:[#allocation5 + $0x2c] sm:$0xf]
    %v79 = vld [vmem:[#allocation5 + $0x30] sm:$0xf]
    %v80 = vld [vmem:[#allocation5 + $0x34] sm:$0xf]
    %v81 = vld [vmem:[#allocation5 + $0x38] sm:$0xf]
    %v82 = vld [vmem:[#allocation5 + $0x3c] sm:$0xf]
    %v83 = vld [vmem:[#allocation5 + $0x40] sm:$0xf]
    %v84 = vld [vmem:[#allocation5 + $0x44] sm:$0xf]
    %v85 = vld [vmem:[#allocation5 + $0x48] sm:$0xf]
    %v86 = vld [vmem:[#allocation5 + $0x4c] sm:$0xf]
    %v87 = vld [vmem:[#allocation5 + $0x50] sm:$0xf]
    %v88 = vld [vmem:[#allocation5 + $0x54] sm:$0xf]
    %v89 = vld [vmem:[#allocation5 + $0x58] sm:$0xf]
    %v90 = vld [vmem:[#allocation5 + $0x5c] sm:$0xf]
    %v91 = vld [vmem:[#allocation5 + $0x60] sm:$0xf]
    %v92 = vld [vmem:[#allocation5 + $0x64] sm:$0xf]
    %v93 = vld [vmem:[#allocation5 + $0x68] sm:$0xf]
    %v94 = vld [vmem:[#allocation5 + $0x6c] sm:$0xf]
    %v95 = vld [vmem:[#allocation5 + $0x70] sm:$0xf]
    %v96 = vld [vmem:[#allocation5 + $0x74] sm:$0xf]
    %v97 = vld [vmem:[#allocation5 + $0x78] sm:$0xf]
    %v98 = vld [vmem:[#allocation5 + $0x7c] sm:$0xf]
    %v99 = vld [vmem:[#allocation5 + $0x80] sm:$0xf]
    %v100 = vld [vmem:[#allocation5 + $0x84] sm:$0xf]
    %v101 = vld [vmem:[#allocation5 + $0x88] sm:$0xf]
    %v102 = vld [vmem:[#allocation5 + $0x8c] sm:$0xf]
    %v103 = vld [vmem:[#allocation5 + $0x90] sm:$0xf]
    %v104 = vld [vmem:[#allocation5 + $0x94] sm:$0xf]
    %v105 = vld [vmem:[#allocation5 + $0x98] sm:$0xf]
    %v106 = vld [vmem:[#allocation5 + $0x9c] sm:$0xf]
    %v107 = vld [vmem:[#allocation5 + $0xa0] sm:$0xf]
    %v108 = vld [vmem:[#allocation5 + $0xa4] sm:$0xf]
    %v109 = vld [vmem:[#allocation5 + $0xa8] sm:$0xf]
    %v110 = vld [vmem:[#allocation5 + $0xac] sm:$0xf]
    %v111 = vld [vmem:[#allocation5 + $0xb0] sm:$0xf]
    %v112 = vld [vmem:[#allocation5 + $0xb4] sm:$0xf]
    %v113 = vld [vmem:[#allocation5 + $0xb8] sm:$0xf]
    %v114 = vld [vmem:[#allocation5 + $0xbc] sm:$0xf]
    %v115 = vld [vmem:[#allocation5 + $0xc0] sm:$0xf]
    %v116 = vld [vmem:[#allocation5 + $0xc4] sm:$0xf]
    %v117 = vld [vmem:[#allocation5 + $0xc8] sm:$0xf]
    %v118 = vld [vmem:[#allocation5 + $0xcc] sm:$0xf]
    %v119 = vld [vmem:[#allocation5 + $0xd0] sm:$0xf]
    %v120 = vld [vmem:[#allocation5 + $0xd4] sm:$0xf]
    %v121 = vld [vmem:[#allocation5 + $0xd8] sm:$0xf]
    %v122 = vld [vmem:[#allocation5 + $0xdc] sm:$0xf]
    %v123 = vld [vmem:[#allocation5 + $0xe0] sm:$0xf]
    %v124 = vld [vmem:[#allocation5 + $0xe4] sm:$0xf]
    %v125 = vld [vmem:[#allocation5 + $0xe8] sm:$0xf]
    %v126 = vld [vmem:[#allocation5 + $0xec] sm:$0xf]
    %v127 = vld [vmem:[#allocation5 + $0xf0] sm:$0xf]
    %v128 = vld [vmem:[#allocation5 + $0xf4] sm:$0xf]
    %v129 = vld [vmem:[#allocation5 + $0xf8] sm:$0xf]
    %v130 = vld [vmem:[#allocation5 + $0xfc] sm:$0xf]
    %v131 = vld [vmem:[%s2] sm:$0x1]
    %v133 = vlaneseq
    %v134 = vshrl.u32 %v133, 7
    %v135 = vsub.s32 0, %v134
    %v136 = vrot.slane %v131, %v135
    %v142 = vunpack.c.l.b16 %v63
    %v143 = vunpack.c.h.b16 %v63
    %v144 = vunpack.c.l.b16 %v64
    %v145 = vunpack.c.h.b16 %v64
    %v146 = vunpack.c.l.b16 %v65
    %v147 = vunpack.c.h.b16 %v65
    %v148 = vunpack.c.l.b16 %v66
    %v149 = vunpack.c.h.b16 %v66
    %v150 = vpack.c.b16 %v146, %v142
    %v151 = vpack.c.b16 %v147, %v143
    %v152 = vpack.c.b16 %v148, %v144
    %v153 = vpack.c.b16 %v149, %v145
    %v222 = vunpack.c.l.b16 %v67
    %v223 = vunpack.c.l.b16 %v68
    %v224 = vunpack.c.l.b16 %v69
    %v225 = vunpack.c.l.b16 %v70
    %v226 = vunpack.c.l.b16 %v71
    %v227 = vunpack.c.l.b16 %v72
    %v228 = vunpack.c.l.b16 %v73
    %v229 = vunpack.c.l.b16 %v74
    %v230 = vunpack.c.l.b16 %v75
    %v231 = vunpack.c.l.b16 %v76
    %v232 = vunpack.c.l.b16 %v77
    %v233 = vunpack.c.l.b16 %v78
    %v234 = vunpack.c.l.b16 %v79
    %v235 = vunpack.c.l.b16 %v80
    %v236 = vunpack.c.l.b16 %v81
    %v237 = vunpack.c.l.b16 %v82
    %v238 = vunpack.c.l.b16 %v83
    %v239 = vunpack.c.l.b16 %v84
    %v240 = vunpack.c.l.b16 %v85
    %v241 = vunpack.c.l.b16 %v86
    %v242 = vunpack.c.l.b16 %v87
    %v243 = vunpack.c.l.b16 %v88
    %v244 = vunpack.c.l.b16 %v89
    %v245 = vunpack.c.l.b16 %v90
    %v246 = vunpack.c.l.b16 %v91
    %v247 = vunpack.c.l.b16 %v92
    %v248 = vunpack.c.l.b16 %v93
    %v249 = vunpack.c.l.b16 %v94
    %v250 = vunpack.c.l.b16 %v95
    %v251 = vunpack.c.l.b16 %v96
    %v252 = vunpack.c.l.b16 %v97
    %v253 = vunpack.c.l.b16 %v98
    %v254 = vunpack.c.l.b16 %v99
    %v255 = vunpack.c.l.b16 %v100
    %v256 = vunpack.c.l.b16 %v101
    %v257 = vunpack.c.l.b16 %v102
    %v258 = vunpack.c.l.b16 %v103
    %v259 = vunpack.c.l.b16 %v104
    %v260 = vunpack.c.l.b16 %v105
    %v261 = vunpack.c.l.b16 %v106
    %v262 = vunpack.c.l.b16 %v107
    %v263 = vunpack.c.l.b16 %v108
    %v264 = vunpack.c.l.b16 %v109
    %v265 = vunpack.c.l.b16 %v110
    %v266 = vunpack.c.l.b16 %v111
    %v267 = vunpack.c.l.b16 %v112
    %v268 = vunpack.c.l.b16 %v113
    %v269 = vunpack.c.l.b16 %v114
    %v270 = vunpack.c.l.b16 %v115
    %v271 = vunpack.c.l.b16 %v116
    %v272 = vunpack.c.l.b16 %v117
    %v273 = vunpack.c.l.b16 %v118
    %v274 = vunpack.c.l.b16 %v119
    %v275 = vunpack.c.l.b16 %v120
    %v276 = vunpack.c.l.b16 %v121
    %v277 = vunpack.c.l.b16 %v122
    %v278 = vunpack.c.l.b16 %v123
    %v279 = vunpack.c.l.b16 %v124
    %v280 = vunpack.c.l.b16 %v125
    %v281 = vunpack.c.l.b16 %v126
    %v282 = vunpack.c.l.b16 %v127
    %v283 = vunpack.c.l.b16 %v128
    %v284 = vunpack.c.l.b16 %v129
    %v285 = vunpack.c.l.b16 %v130
    %v286 = vpack.c.b16 %v223, %v222
    %v287 = vpack.c.b16 %v225, %v224
    %v288 = vpack.c.b16 %v227, %v226
    %v289 = vpack.c.b16 %v229, %v228
    %v290 = vpack.c.b16 %v231, %v230
    %v291 = vpack.c.b16 %v233, %v232
    %v292 = vpack.c.b16 %v235, %v234
    %v293 = vpack.c.b16 %v237, %v236
    %v294 = vpack.c.b16 %v239, %v238
    %v295 = vpack.c.b16 %v241, %v240
    %v296 = vpack.c.b16 %v243, %v242
    %v297 = vpack.c.b16 %v245, %v244
    %v298 = vpack.c.b16 %v247, %v246
    %v299 = vpack.c.b16 %v249, %v248
    %v300 = vpack.c.b16 %v251, %v250
    %v301 = vpack.c.b16 %v253, %v252
    %v302 = vpack.c.b16 %v255, %v254
    %v303 = vpack.c.b16 %v257, %v256
    %v304 = vpack.c.b16 %v259, %v258
    %v305 = vpack.c.b16 %v261, %v260
    %v306 = vpack.c.b16 %v263, %v262
    %v307 = vpack.c.b16 %v265, %v264
    %v308 = vpack.c.b16 %v267, %v266
    %v309 = vpack.c.b16 %v269, %v268
    %v310 = vpack.c.b16 %v271, %v270
    %v311 = vpack.c.b16 %v273, %v272
    %v312 = vpack.c.b16 %v275, %v274
    %v313 = vpack.c.b16 %v277, %v276
    %v314 = vpack.c.b16 %v279, %v278
    %v315 = vpack.c.b16 %v281, %v280
    %v316 = vpack.c.b16 %v283, %v282
    %v317 = vpack.c.b16 %v285, %v284
    %350 = vmatprep.subr.bf16.mxu0 0
    %351 = vmatpush1.bf16.msra.mxu0 %v293
    %352 = vmatprep.subr.bf16.mxu0 0
    %353 = vmatpush1.bf16.msra.mxu0 %v292
    %354 = vmatprep.subr.bf16.mxu0 0
    %355 = vmatpush1.bf16.msra.mxu0 %v291
    %356 = vmatprep.subr.bf16.mxu0 0
    %357 = vmatpush1.bf16.msra.mxu0 %v290
    %358 = vmatprep.subr.bf16.mxu0 0
    %359 = vmatpush1.bf16.msra.mxu0 %v289
    %360 = vmatprep.subr.bf16.mxu0 0
    %361 = vmatpush1.bf16.msra.mxu0 %v288
    %362 = vmatprep.subr.bf16.mxu0 0
    %363 = vmatpush1.bf16.msra.mxu0 %v287
    %364 = vmatprep.subr.bf16.mxu0 0
    %365 = vmatpush1.bf16.msra.mxu0 %v286
    %366 = vmatprep.subr.bf16.mxu0 0
    %367 = vmatpush2.bf16.msra.mxu0 %v301
    %368 = vmatprep.subr.bf16.mxu0 0
    %369 = vmatpush2.bf16.msra.mxu0 %v300
    %370 = vmatprep.subr.bf16.mxu0 0
    %371 = vmatpush2.bf16.msra.mxu0 %v299
    %372 = vmatprep.subr.bf16.mxu0 0
    %373 = vmatpush2.bf16.msra.mxu0 %v298
    %374 = vmatprep.subr.bf16.mxu0 0
    %375 = vmatpush2.bf16.msra.mxu0 %v297
    %376 = vmatprep.subr.bf16.mxu0 0
    %377 = vmatpush2.bf16.msra.mxu0 %v296
    %378 = vmatprep.subr.bf16.mxu0 0
    %379 = vmatpush2.bf16.msra.mxu0 %v295
    %380 = vmatprep.subr.bf16.mxu0 0
    %381 = vmatpush2.bf16.msra.mxu0 %v294
    %382 = vmatprep.mubr.bf16.mxu0 %v151
    %383 = vmatmul.mubr.bf16.gmra.mxu0 %v150
    %v384 = vpop.f32.mrf.mxu0
    %v385 = vadd.f32 %v136, %v384
    %v386 = vpop.f32.mrf.mxu0
    %v387 = vpop.f32.mrf.mxu0
    %v388 = vadd.f32 %v136, %v387
    %v389 = vpop.f32.mrf.mxu0
    %390 = vdwg.mxu0
    %391 = vmatprep.subr.bf16.mxu0 0
    %392 = vmatpush1.bf16.msra.mxu0 %v309
    %393 = vmatprep.subr.bf16.mxu0 0
    %394 = vmatpush1.bf16.msra.mxu0 %v308
    %395 = vmatprep.subr.bf16.mxu0 0
    %396 = vmatpush1.bf16.msra.mxu0 %v307
    %397 = vmatprep.subr.bf16.mxu0 0
    %398 = vmatpush1.bf16.msra.mxu0 %v306
    %399 = vmatprep.subr.bf16.mxu0 0
    %400 = vmatpush1.bf16.msra.mxu0 %v305
    %401 = vmatprep.subr.bf16.mxu0 0
    %402 = vmatpush1.bf16.msra.mxu0 %v304
    %403 = vmatprep.subr.bf16.mxu0 0
    %404 = vmatpush1.bf16.msra.mxu0 %v303
    %405 = vmatprep.subr.bf16.mxu0 0
    %406 = vmatpush1.bf16.msra.mxu0 %v302
    %407 = vmatprep.subr.bf16.mxu0 0
    %408 = vmatpush2.bf16.msra.mxu0 %v317
    %409 = vmatprep.subr.bf16.mxu0 0
    %410 = vmatpush2.bf16.msra.mxu0 %v316
    %411 = vmatprep.subr.bf16.mxu0 0
    %412 = vmatpush2.bf16.msra.mxu0 %v315
    %413 = vmatprep.subr.bf16.mxu0 0
    %414 = vmatpush2.bf16.msra.mxu0 %v314
    %415 = vmatprep.subr.bf16.mxu0 0
    %416 = vmatpush2.bf16.msra.mxu0 %v313
    %417 = vmatprep.subr.bf16.mxu0 0
    %418 = vmatpush2.bf16.msra.mxu0 %v312
    %419 = vmatprep.subr.bf16.mxu0 0
    %420 = vmatpush2.bf16.msra.mxu0 %v311
    %421 = vmatprep.subr.bf16.mxu0 0
    %422 = vmatpush2.bf16.msra.mxu0 %v310
    %423 = vmatprep.mubr.bf16.mxu0 %v153
    %424 = vmatmul.mubr.bf16.gmra.mxu0 %v152
    %v425 = vpop.f32.mrf.mxu0
    %v426 = vadd.f32 %v385, %v425
    %v427 = vpop.f32.mrf.mxu0
    %v428 = vpop.f32.mrf.mxu0
    %v429 = vadd.f32 %v388, %v428
    %v430 = vpop.f32.mrf.mxu0
    %431 = vdwg.mxu0
    %v432 = vmax.f32 %v426, 0.0
    %v433 = vmax.f32 %v429, 0.0
    %v434 = vpack.c.bf16 %v433, %v432
    %v435 = vld [vmem:[#allocation7] sm:$0xf]
    %v436 = vld [vmem:[#allocation7 + $0x4] sm:$0xf]
    %v437 = vld [vmem:[#allocation7 + $0x8] sm:$0xf]
    %v438 = vld [vmem:[#allocation7 + $0xc] sm:$0xf]
    %v439 = vld [vmem:[#allocation7 + $0x10] sm:$0xf]
    %v440 = vld [vmem:[#allocation7 + $0x14] sm:$0xf]
    %v441 = vld [vmem:[#allocation7 + $0x18] sm:$0xf]
    %v442 = vld [vmem:[#allocation7 + $0x1c] sm:$0xf]
    %v443 = vld [vmem:[#allocation7 + $0x20] sm:$0xf]
    %v444 = vld [vmem:[#allocation7 + $0x24] sm:$0xf]
    %v445 = vld [vmem:[#allocation7 + $0x28] sm:$0xf]
    %v446 = vld [vmem:[#allocation7 + $0x2c] sm:$0xf]
    %v447 = vld [vmem:[#allocation7 + $0x30] sm:$0xf]
    %v448 = vld [vmem:[#allocation7 + $0x34] sm:$0xf]
    %v449 = vld [vmem:[#allocation7 + $0x38] sm:$0xf]
    %v450 = vld [vmem:[#allocation7 + $0x3c] sm:$0xf]
    %v451 = vld [vmem:[%s4] sm:$0x1]
    %v453 = vlaneseq
    %v454 = vshrl.u32 %v453, 7
    %v455 = vsub.s32 0, %v454
    %v456 = vrot.slane %v451, %v455
    %v474 = vunpack.c.l.b16 %v435
    %v475 = vunpack.c.l.b16 %v436
    %v476 = vunpack.c.l.b16 %v437
    %v477 = vunpack.c.l.b16 %v438
    %v478 = vunpack.c.l.b16 %v439
    %v479 = vunpack.c.l.b16 %v440
    %v480 = vunpack.c.l.b16 %v441
    %v481 = vunpack.c.l.b16 %v442
    %v482 = vunpack.c.l.b16 %v443
    %v483 = vunpack.c.l.b16 %v444
    %v484 = vunpack.c.l.b16 %v445
    %v485 = vunpack.c.l.b16 %v446
    %v486 = vunpack.c.l.b16 %v447
    %v487 = vunpack.c.l.b16 %v448
    %v488 = vunpack.c.l.b16 %v449
    %v489 = vunpack.c.l.b16 %v450
    %v490 = vpack.c.b16 %v475, %v474
    %v491 = vpack.c.b16 %v477, %v476
    %v492 = vpack.c.b16 %v479, %v478
    %v493 = vpack.c.b16 %v481, %v480
    %v494 = vpack.c.b16 %v483, %v482
    %v495 = vpack.c.b16 %v485, %v484
    %v496 = vpack.c.b16 %v487, %v486
    %v497 = vpack.c.b16 %v489, %v488
    %506 = vmatprep.subr.bf16.mxu0 0
    %507 = vmatpush1.bf16.msra.mxu0 %v497
    %508 = vmatprep.subr.bf16.mxu0 0
    %509 = vmatpush1.bf16.msra.mxu0 %v496
    %510 = vmatprep.subr.bf16.mxu0 0
    %511 = vmatpush1.bf16.msra.mxu0 %v495
    %512 = vmatprep.subr.bf16.mxu0 0
    %513 = vmatpush1.bf16.msra.mxu0 %v494
    %514 = vmatprep.subr.bf16.mxu0 0
    %515 = vmatpush1.bf16.msra.mxu0 %v493
    %516 = vmatprep.subr.bf16.mxu0 0
    %517 = vmatpush1.bf16.msra.mxu0 %v492
    %518 = vmatprep.subr.bf16.mxu0 0
    %519 = vmatpush1.bf16.msra.mxu0 %v491
    %520 = vmatprep.subr.bf16.mxu0 0
    %521 = vmatpush1.bf16.msra.mxu0 %v490
    %522 = vmatprep.subr.bf16.mxu0 0
    %523 = vmatpush2.bf16.msra.mxu0 0
    %524 = vmatprep.subr.bf16.mxu0 0
    %525 = vmatpush2.bf16.msra.mxu0 0
    %526 = vmatprep.subr.bf16.mxu0 0
    %527 = vmatpush2.bf16.msra.mxu0 0
    %528 = vmatprep.subr.bf16.mxu0 0
    %529 = vmatpush2.bf16.msra.mxu0 0
    %530 = vmatprep.subr.bf16.mxu0 0
    %531 = vmatpush2.bf16.msra.mxu0 0
    %532 = vmatprep.subr.bf16.mxu0 0
    %533 = vmatpush2.bf16.msra.mxu0 0
    %534 = vmatprep.subr.bf16.mxu0 0
    %535 = vmatpush2.bf16.msra.mxu0 0
    %536 = vmatprep.subr.bf16.mxu0 0
    %537 = vmatpush2.bf16.msra.mxu0 0
    %538 = vmatprep.mubr.bf16.mxu0 0
    %539 = vmatmul.mubr.bf16.gmra.mxu0 %v434
    %v540 = vpop.f32.mrf.mxu0
    %v541 = vadd.f32 %v456, %v540
    %v542 = vpop.f32.mrf.mxu0
    %v543 = vpop.f32.mrf.mxu0
    %v544 = vadd.f32 %v456, %v543
    %v545 = vpop.f32.mrf.mxu0
    %546 = vdwg.mxu0
    %547 = vst [vmem:[#allocation8] sm:$0xff] %v541
    %548 = vst [vmem:[#allocation8 + $0x8] sm:$0xff] %v544
    // Predicated region
    $region34: #{tpu_custom_call.1} parent=1 // pred_check
      _
    $region35: #{tpu_custom_call.1} parent=1 // pred_check_branch
      %550 = sbr.rel (0) target = $region37
    $region36: #{tpu_custom_call.1} parent=1 // pred_region
      %s552 = ssub.s32 256, 256
      %553 = vsyncadd [#allocation4], %s552
      %s554 = sshll.u32 [#allocation8], 4
      %s555 = int_to_ptr.vmem [resolvable:$true] %s554
      %560 = dma.vmem_to_hbm [thread:$0]  %s555, 256, %s5, [#allocation4], 128, 128, 8
    $region37: #{tpu_custom_call.1} parent=1 // pred_fallthru
      _
    // Predicated region
    $region38: #{tpu_custom_call.1} parent=1 // pred_check
      _
    $region39: #{tpu_custom_call.1} parent=1 // pred_check_branch
      %562 = sbr.rel (0) target = $region41
    $region40: #{tpu_custom_call.1} parent=1 // pred_region
      %563 = dma.done [#allocation4], 256
    $region41: #{tpu_custom_call.1} parent=1 // pred_fallthru
      _
    %564 = vsyncpa [#allocation3], 1
    %565 = vsyncpa [#allocation6], 1
    %566 = vsyncpa [#allocation4], 1

</llo_original>
